<compile_context>
chip_gen: v7x
topology: tpu7x:2x2x1
jax: 0.10.0
libtpu: 0.0.40
codegen_flags: <defaults>
</compile_context>

<pallas_src>
import math

import jax
import jax.numpy as jnp
from jax.experimental import pallas as pl
from jax.experimental.pallas import tpu as pltpu


def _round_up(x, m):
    return ((x + m - 1) // m) * m


def _cdiv(a, b):
    return (a + b - 1) // b


# ----------------------------------------------------------------------------
# Kernels
# ----------------------------------------------------------------------------

def _linear_kernel_single_k(x_ref, w_ref, b_ref, o_ref):
    # x_ref: (tm, K), w_ref: (K, tn), b_ref: (1, tn), o_ref: (tm, tn)
    o_ref[...] = (
        jnp.dot(x_ref[...], w_ref[...], preferred_element_type=jnp.float32)
        + b_ref[...]
    ).astype(o_ref.dtype)


def _linear_kernel_multi_k(x_ref, w_ref, b_ref, o_ref):
    # Output tile is f32 and VMEM-resident across the K ("arbitrary") axis,
    # so it doubles as the accumulator (no separate scratch needed).
    k = pl.program_id(2)

    @pl.when(k == 0)
    def _():
        o_ref[...] = jnp.zeros_like(o_ref)

    o_ref[...] += jnp.dot(x_ref[...], w_ref[...],
                          preferred_element_type=jnp.float32)

    @pl.when(k == pl.num_programs(2) - 1)
    def _():
        o_ref[...] += b_ref[...]


# ----------------------------------------------------------------------------
# Tiling / VMEM budgeting
# ----------------------------------------------------------------------------

_MAX_TILE_MN = 1024
_MAX_TK = 2048


def _vmem_budget_bytes():
    """Per-generation tile budget + matching vmem limit."""
    try:
        cap = pltpu.get_tpu_info().vmem_capacity_bytes
    except Exception:
        cap = 64 * 1024 * 1024  # v7x per-TensorCore size: safe floor everywhere
    budget = int(cap * 0.45)    # tiles (incl. double buffering) stay well inside
    limit = min(cap - 8 * 1024 * 1024, budget + 16 * 1024 * 1024)
    return budget, limit


def _choose_tiles(M, N, K, budget_bytes):
    # M tile: sublane-aligned (8), balanced so edge waste is small.
    m_steps = _cdiv(M, _MAX_TILE_MN)
    tm = min(_round_up(_cdiv(M, m_steps), 8), _MAX_TILE_MN)

    # N tile: lane-dense (>= 128, multiple of 128).
    n_steps = _cdiv(N, _MAX_TILE_MN)
    tn = min(max(_round_up(_cdiv(N, n_steps), 128), 128), _MAX_TILE_MN)

    # K tile: single step when K is small enough, else balanced 256-multiples.
    if K <= _MAX_TK:
        tk = K
    else:
        k_steps = _cdiv(K, _MAX_TK)
        tk = min(_round_up(_cdiv(K, k_steps), 256), _MAX_TK)

    def vmem_bytes(tm_, tn_, tk_):
        # 2x double-buffered x/w input blocks + out blocks + bias blocks.
        return 4 * (2 * tm_ * tk_ + 2 * tk_ * tn_ + 2 * tm_ * tn_ + 2 * tn_)

    # Shrink K first (only adds reduction steps), then N, then M.
    while vmem_bytes(tm, tn, tk) > budget_bytes and tk > 256:
        tk = max(256, _round_up(tk // 2, 256))
    while vmem_bytes(tm, tn, tk) > budget_bytes and tn > 128:
        tn = max(128, tn // 2)
    while vmem_bytes(tm, tn, tk) > budget_bytes and tm > 8:
        tm = max(8, _round_up(tm // 2, 8))

    # v7x megacore: guarantee >= 2 blocks on the "parallel" axes so both
    # TensorCores get work when the shape would otherwise give a 1x1 grid.
    if _cdiv(M, tm) == 1 and _cdiv(N, tn) == 1:
        if tn >= 256:
            tn //= 2
        elif tm >= 16:
            tm = max(8, _round_up(tm // 2, 8))

    return tm, tn, tk


# ----------------------------------------------------------------------------
# Forward wrapper (torch.nn.Linear semantics)
# ----------------------------------------------------------------------------

def linear_forward(x, weight, bias):
    """y = x @ weight.T + bias.

    x:      (..., K) float32
    weight: (N, K)   float32   (PyTorch layout)
    bias:   (N,)     float32
    """
    orig_shape = x.shape
    K = orig_shape[-1]
    N, K2 = weight.shape
    assert K == K2, "input_dim mismatch"
    assert x.dtype == jnp.float32, "output tile doubles as f32 accumulator"

    x2d = x.reshape(-1, K)
    M = x2d.shape[0]

    budget, vmem_limit = _vmem_budget_bytes()
    tm, tn, tk = _choose_tiles(M, N, K, budget)

    # One HBM-side transpose (handled by XLA) gives the MXU a canonical (K, N)
    # RHS; avoids any per-tile XLU transpose inside the kernel.
    w_t = weight.T               # (K, N)
    b2d = bias.reshape(1, N)

    grid_m = _cdiv(M, tm)
    grid_n = _cdiv(N, tn)

    cost = pl.CostEstimate(
        flops=2 * M * N * K,
        transcendentals=0,
        bytes_accessed=4 * (M * K + N * K + M * N + N),
    )

    if tk >= K:
        # --- single reduction step: no K grid axis, no zero-init/revisits ---
        out = pl.pallas_call(
            _linear_kernel_single_k,
            out_shape=jax.ShapeDtypeStruct((M, N), x.dtype),
            grid_spec=pltpu.PrefetchScalarGridSpec(
                num_scalar_prefetch=0,
                grid=(grid_m, grid_n),
                in_specs=[
                    pl.BlockSpec((tm, K), lambda i, j: (i, 0)),   # x
                    pl.BlockSpec((K, tn), lambda i, j: (0, j)),   # W.T
                    pl.BlockSpec((1, tn), lambda i, j: (0, j)),   # bias
                ],
                out_specs=pl.BlockSpec((tm, tn), lambda i, j: (i, j)),
            ),
            compiler_params=pltpu.CompilerParams(
                dimension_semantics=("parallel", "parallel"),
                vmem_limit_bytes=vmem_limit,
            ),
            cost_estimate=cost,
        )(x2d, w_t, b2d)
    else:
        # --- multi-step K reduction ---
        # Only K padding is correctness-critical (zeros contribute nothing to
        # the accumulation); ragged M/N edge blocks are handled by Pallas with
        # masked output stores.
        Kp = _round_up(K, tk)
        if Kp != K:
            x2d = jnp.pad(x2d, ((0, 0), (0, Kp - K)))
            w_t = jnp.pad(w_t, ((0, Kp - K), (0, 0)))
        out = pl.pallas_call(
            _linear_kernel_multi_k,
            out_shape=jax.ShapeDtypeStruct((M, N), x.dtype),
            grid_spec=pltpu.PrefetchScalarGridSpec(
                num_scalar_prefetch=0,
                grid=(grid_m, grid_n, Kp // tk),
                in_specs=[
                    pl.BlockSpec((tm, tk), lambda i, j, k: (i, k)),  # x
                    pl.BlockSpec((tk, tn), lambda i, j, k: (k, j)),  # W.T
                    pl.BlockSpec((1, tn), lambda i, j, k: (0, j)),   # bias
                ],
                out_specs=pl.BlockSpec((tm, tn), lambda i, j, k: (i, j)),
            ),
            compiler_params=pltpu.CompilerParams(
                dimension_semantics=("parallel", "parallel", "arbitrary"),
                vmem_limit_bytes=vmem_limit,
            ),
            cost_estimate=cost,
        )(x2d, w_t, b2d)

    return out.reshape(orig_shape[:-1] + (N,))


def init_linear_params(key, input_dim, output_dim):
    # Mimics torch.nn.Linear default init: U(-1/sqrt(in), 1/sqrt(in)).
    kw, kb = jax.random.split(key)
    bound = 1.0 / math.sqrt(input_dim)
    weight = jax.random.uniform(
        kw, (output_dim, input_dim), jnp.float32, minval=-bound, maxval=bound
    )
    bias = jax.random.uniform(
        kb, (output_dim,), jnp.float32, minval=-bound, maxval=bound
    )
    return weight, bias


if __name__ == "__main__":
    key = jax.random.PRNGKey(0)

    # --- small shape consistent with the module's demo usage ---------------
    batch, input_dim, output_dim = 8, 32, 16
    kx, kp, key = jax.random.split(key, 3)
    x = jax.random.normal(kx, (batch, input_dim), jnp.float32)
    weight, bias = init_linear_params(kp, input_dim, output_dim)

    y = jax.block_until_ready(linear_forward(x, weight, bias))
    y_ref = x @ weight.T + bias
    assert y.shape == (batch, output_dim)
    assert jnp.allclose(y, y_ref, atol=1e-4, rtol=1e-4)

    # --- unaligned shapes: ragged M/N edge blocks, single-K-step path ------
    M2, K2, N2 = 300, 200, 130
    kx2, kp2, key = jax.random.split(key, 3)
    x2 = jax.random.normal(kx2, (M2, K2), jnp.float32)
    w2, b2 = init_linear_params(kp2, K2, N2)

    y2 = jax.block_until_ready(linear_forward(x2, w2, b2))
    y2_ref = x2 @ w2.T + b2
    assert y2.shape == (M2, N2)
    assert jnp.allclose(y2, y2_ref, atol=1e-4, rtol=1e-4)

    # --- large-K shape: exercises the multi-step (accumulate-in-o_ref) path -
    M3, K3, N3 = 32, 4352, 48
    kx3, kp3 = jax.random.split(key)
    x3 = jax.random.normal(kx3, (M3, K3), jnp.float32)
    w3, b3 = init_linear_params(kp3, K3, N3)

    y3 = jax.block_until_ready(linear_forward(x3, w3, b3))
    y3_ref = x3 @ w3.T + b3
    assert y3.shape == (M3, N3)
    assert jnp.allclose(y3, y3_ref, atol=1e-3, rtol=1e-3)

    print("KERNEL_OK")
</pallas_src>

<mosaic_0001>
module attributes {stable_mosaic.version = 11 : i64} {
  func.func @_linear_kernel_single_k(%arg0: i32, %arg1: i32, %arg2: memref<8x32xf32, #tpu.memory_space<vmem>>, %arg3: memref<32x128xf32, #tpu.memory_space<vmem>>, %arg4: memref<1x128xf32, #tpu.memory_space<vmem>>, %arg5: memref<8x128xf32, #tpu.memory_space<vmem>>) attributes {dimension_semantics = [#tpu.dimension_semantics<parallel>, #tpu.dimension_semantics<parallel>], iteration_bounds = array<i64: 1, 1>, scalar_prefetch = 0 : i64, scratch_operands = 0 : i64, tpu.core_type = #tpu.core_type<tc>, window_params = [{transform_indices = @transform_0, window_bounds = array<i64: 8, 32>}, {transform_indices = @transform_1, window_bounds = array<i64: 32, 128>}, {transform_indices = @transform_2, window_bounds = array<i64: 1, 128>}, {transform_indices = @transform_3, window_bounds = array<i64: 8, 128>}]} {
    %c0 = arith.constant 0 : index
    %c0_0 = arith.constant 0 : index
    %0 = vector.load %arg2[%c0, %c0_0] : memref<8x32xf32, #tpu.memory_space<vmem>>, vector<8x32xf32>
    %c0_1 = arith.constant 0 : index
    %c0_2 = arith.constant 0 : index
    %1 = vector.load %arg3[%c0_1, %c0_2] : memref<32x128xf32, #tpu.memory_space<vmem>>, vector<32x128xf32>
    %cst = arith.constant dense<0.000000e+00> : vector<8x128xf32>
    %2 = tpu.matmul %0, %1, %cst {dimension_numbers = #tpu.dot_dimension_numbers<[1], [0], [0], [1], [0, 0, 1, 1], [], []>} : vector<8x32xf32>, vector<32x128xf32>, vector<8x128xf32> -> vector<8x128xf32>
    %c0_3 = arith.constant 0 : index
    %c0_4 = arith.constant 0 : index
    %3 = vector.load %arg4[%c0_3, %c0_4] : memref<1x128xf32, #tpu.memory_space<vmem>>, vector<1x128xf32>
    %4 = vector.broadcast %3 : vector<1x128xf32> to vector<8x128xf32>
    %5 = arith.addf %2, %4 : vector<8x128xf32>
    %c0_5 = arith.constant 0 : index
    %c0_6 = arith.constant 0 : index
    %6 = vector.load %arg5[%c0_5, %c0_6] : memref<8x128xf32, #tpu.memory_space<vmem>>, vector<8x128xf32>
    tpu.vector_store %arg5[%c0_5, %c0_6], %5 {strides = array<i32>} : memref<8x128xf32, #tpu.memory_space<vmem>>, vector<8x128xf32>,
    return
  }
  func.func @transform_0(%arg0: i32, %arg1: i32) -> (i32, i32) {
    %c0_i32 = arith.constant 0 : i32
    %c0_i32_0 = arith.constant 0 : i32
    return %arg0, %c0_i32 : i32, i32
  }
  func.func @transform_1(%arg0: i32, %arg1: i32) -> (i32, i32) {
    %c0_i32 = arith.constant 0 : i32
    %c0_i32_0 = arith.constant 0 : i32
    return %c0_i32, %arg1 : i32, i32
  }
  func.func @transform_2(%arg0: i32, %arg1: i32) -> (i32, i32) {
    %c0_i32 = arith.constant 0 : i32
    %c0_i32_0 = arith.constant 0 : i32
    return %c0_i32, %arg1 : i32, i32
  }
  func.func @transform_3(%arg0: i32, %arg1: i32) -> (i32, i32) {
    %c0_i32 = arith.constant 0 : i32
    return %arg0, %arg1 : i32, i32
  }
}

</mosaic_0001>

<llo_original>
// kernel: tpu_custom_call.1
$region0: #{tpu_custom_call.1}
  #allocation0 [shape = 'u32[]', space=smem, size = 0x4, offset = 0x4, fixed_abs, tag = 'smem constant byte address 0x4 - core index']
  #allocation1 [shape = 'u32[144,128]{1,0:T(1,128)}', space=vmem, size = 0x12000, scoped, tag = 'internal scratch']
  %s0 = inlined_call_operand.vmem [shape: f32[8,32], index: 0, kind: input, shape index: {}]
  %s1 = inlined_call_operand.vmem [shape: f32[32,16], index: 1, kind: input, shape index: {}]
  %s2 = inlined_call_operand.vmem [shape: f32[1,16], index: 2, kind: input, shape index: {}]
  %s3 = inlined_call_operand.hbm [shape: f32[8,16], index: 3, kind: output, shape index: {}]
  %s4 = sld [smem:[#allocation0]]
  $region22: #{tpu_custom_call.1} parent=0
    _
  %s6 = ssub.s32 1, %s4
  %s7 = scalar_select 0, %s6, %s4
  $region1: #{tpu_custom_call.1} parent=0
    #allocation2 [shape = 'u8[4096]{0}', space=vmem, size = 0x1000, scoped, tag = 'output window, operand 0, single buffered']
    #allocation3 [shape = 's32[1]{0}', space=sflag, size = 0x4, scoped, tag = 'scoped memory for tpu_custom_call.1']
    %8 = vsyncpa [#allocation3], 0
    // Predicated region
    $region2: #{tpu_custom_call.1} parent=1 // pred_check
      _
    $region3: #{tpu_custom_call.1} parent=1 // pred_check_branch
      %10 = sbr.rel (0) target = $region5
    $region4: #{tpu_custom_call.1} parent=1 // pred_region
      _
    $region5: #{tpu_custom_call.1} parent=1 // pred_fallthru
      _
    // Predicated region
    $region6: #{tpu_custom_call.1} parent=1 // pred_check
      _
    $region7: #{tpu_custom_call.1} parent=1 // pred_check_branch
      %12 = sbr.rel (0) target = $region9
    $region8: #{tpu_custom_call.1} parent=1 // pred_region
      _
    $region9: #{tpu_custom_call.1} parent=1 // pred_fallthru
      _
    // Predicated region
    $region10: #{tpu_custom_call.1} parent=1 // pred_check
      _
    $region11: #{tpu_custom_call.1} parent=1 // pred_check_branch
      %14 = sbr.rel (0) target = $region13
    $region12: #{tpu_custom_call.1} parent=1 // pred_region
      _
    $region13: #{tpu_custom_call.1} parent=1 // pred_fallthru
      _
    %v15 = vld [vmem:[%s0] sm:$0xff]
    %v16 = vld [vmem:[%s1] sm:$0xff]
    %v17 = vld [vmem:[%s1 + $0x8] sm:$0xff]
    %v18 = vld [vmem:[%s1 + $0x10] sm:$0xff]
    %v19 = vld [vmem:[%s1 + $0x18] sm:$0xff]
    %v20 = vld [vmem:[%s2] sm:$0x1]
    %v22 = vlaneseq
    %v23 = vshrl.u32 %v22, 7
    %v24 = vsub.s32 0, %v23
    %v25 = vrot.slane %v20, %v24
    %vm27 = vcmask 261120
    %v29 = vsel %vm27, %v15, 0
    %31 = vmatprep.subr.mxu0 0.0
    %32 = vmatpush1.msra.mxu0 %v16
    %33 = vmatprep.subr.mxu0 0.0
    %34 = vmatpush1.msra.mxu0 %v17
    %35 = vmatprep.subr.mxu0 0.0
    %36 = vmatpush1.msra.mxu0 %v18
    %37 = vmatprep.subr.mxu0 0.0
    %38 = vmatpush1.msra.mxu0 %v19
    %39 = vmatprep.subr.mxu0 0.0
    %40 = vmatpush1.msra.mxu0 0.0
    %41 = vmatprep.subr.mxu0 0.0
    %42 = vmatpush1.msra.mxu0 0.0
    %43 = vmatprep.subr.mxu0 0.0
    %44 = vmatpush1.msra.mxu0 0.0
    %45 = vmatprep.subr.mxu0 0.0
    %46 = vmatpush1.msra.mxu0 0.0
    %47 = vmatprep.subr.mxu0 0.0
    %48 = vmatpush1.msra.mxu0 0.0
    %49 = vmatprep.subr.mxu0 0.0
    %50 = vmatpush1.msra.mxu0 0.0
    %51 = vmatprep.subr.mxu0 0.0
    %52 = vmatpush1.msra.mxu0 0.0
    %53 = vmatprep.subr.mxu0 0.0
    %54 = vmatpush1.msra.mxu0 0.0
    %55 = vmatprep.subr.mxu0 0.0
    %56 = vmatpush1.msra.mxu0 0.0
    %57 = vmatprep.subr.mxu0 0.0
    %58 = vmatpush1.msra.mxu0 0.0
    %59 = vmatprep.subr.mxu0 0.0
    %60 = vmatpush1.msra.mxu0 0.0
    %61 = vmatprep.subr.mxu0 0.0
    %62 = vmatpush1.msra.mxu0 0.0
    %63 = vmatprep.subr.mxu0 0.0
    %64 = vmatpush1.msra.mxu0 0.0
    %65 = vmatprep.subr.mxu0 0.0
    %66 = vmatpush1.msra.mxu0 0.0
    %67 = vmatprep.subr.mxu0 0.0
    %68 = vmatpush1.msra.mxu0 0.0
    %69 = vmatprep.subr.mxu0 0.0
    %70 = vmatpush1.msra.mxu0 0.0
    %71 = vmatprep.subr.mxu0 0.0
    %72 = vmatpush1.msra.mxu0 0.0
    %73 = vmatprep.subr.mxu0 0.0
    %74 = vmatpush1.msra.mxu0 0.0
    %75 = vmatprep.subr.mxu0 0.0
    %76 = vmatpush1.msra.mxu0 0.0
    %77 = vmatprep.subr.mxu0 0.0
    %78 = vmatpush1.msra.mxu0 0.0
    %79 = vmatprep.subr.mxu0 0.0
    %80 = vmatpush1.msra.mxu0 0.0
    %81 = vmatprep.subr.mxu0 0.0
    %82 = vmatpush1.msra.mxu0 0.0
    %83 = vmatprep.subr.mxu0 0.0
    %84 = vmatpush1.msra.mxu0 0.0
    %85 = vmatprep.subr.mxu0 0.0
    %86 = vmatpush1.msra.mxu0 0.0
    %87 = vmatprep.subr.mxu0 0.0
    %88 = vmatpush1.msra.mxu0 0.0
    %89 = vmatprep.subr.mxu0 0.0
    %90 = vmatpush1.msra.mxu0 0.0
    %91 = vmatprep.subr.mxu0 0.0
    %92 = vmatpush1.msra.mxu0 0.0
    %93 = vmatprep.subr.mxu0 0.0
    %94 = vmatpush1.msra.mxu0 0.0
    %95 = vmatprep.mubr.f32.mxu0 0.0
    %96 = vmatmul.mubr.f32.gmra.mrb[0].mxu0 %v29
    %v97 = vpop.f32.mrb[0].mxu0
    %v98 = vadd.f32 %v25, %v97
    %v99 = vpop.f32.mrb[0].mxu0
    %100 = vdwg.mxu0
    %101 = vst [vmem:[#allocation2] sm:$0xff] %v98
    // Predicated region
    $region14: #{tpu_custom_call.1} parent=1 // pred_check
      _
    $region15: #{tpu_custom_call.1} parent=1 // pred_check_branch
      %103 = sbr.rel (0) target = $region17
    $region16: #{tpu_custom_call.1} parent=1 // pred_region
      %s105 = ssub.s32 128, 128
      %106 = vsyncadd [#allocation3], %s105
      %s108 = sshll.u32 [#allocation2], 4
      %s109 = int_to_ptr.vmem [resolvable:$true] %s108
      %111 = dma.vmem_to_hbm [thread:$0]  %s109, 128, %s3, [#allocation3]
    $region17: #{tpu_custom_call.1} parent=1 // pred_fallthru
      _
    // Predicated region
    $region18: #{tpu_custom_call.1} parent=1 // pred_check
      _
    $region19: #{tpu_custom_call.1} parent=1 // pred_check_branch
      %113 = sbr.rel (0) target = $region21
    $region20: #{tpu_custom_call.1} parent=1 // pred_region
      %114 = dma.done [#allocation3], 128
    $region21: #{tpu_custom_call.1} parent=1 // pred_fallthru
      _
    %115 = vsyncpa [#allocation3], 1

</llo_original>
